<compile_context>
chip_gen: v6e
topology: v6e:2x2x1
jax: 0.10.0
libtpu: 0.0.40
codegen_flags: <defaults>
</compile_context>

<pallas_src>
import math

import jax
import jax.numpy as jnp
from jax.experimental import pallas as pl
from jax.experimental.pallas import tpu as pltpu


def eca_kernel_size(channels, b=1, gamma=2):
    """Adaptive kernel size, identical to eca_layer.kernel_size()."""
    k = int(abs(math.log2(channels) / gamma + b / gamma))
    return k if k % 2 else k + 1


def _tpu_vmem_bytes():
    """Physical VMEM per TensorCore; conservative (v7x) fallback on failure."""
    try:
        info = pltpu.get_tpu_info()
        for name in ("vmem_capacity_bytes", "vmem_bytes", "vmem_size_bytes"):
            v = getattr(info, name, None)
            if v:
                return int(v)
    except Exception:
        pass
    return 64 * 1024 * 1024


def _pick_batch_tile(B, C, bytes_per_batch, *, target_bytes, two_cores):
    """Batch elements per grid step.

    Legality: Bt divides B and the block sublane dim (Bt*C) is a multiple of
    8 OR equals the full row extent (B*C).  On 2-TC chips prefer >=2 grid
    steps so both TensorCores get work; on 1-TC chips take the biggest block
    under target_bytes (fewer steps -> less per-step pipeline overhead).
    """
    total_rows = B * C

    def legal(bt):
        rows = bt * C
        return (rows % 8 == 0) or (rows == total_rows)

    cands = [bt for bt in range(1, B + 1) if B % bt == 0 and legal(bt)]
    if two_cores:
        multi = [bt for bt in cands if B // bt >= 2]
        if multi:
            cands = multi
        # TODO(synk): for B == 1 on v7x, split the channel axis with a
        # +/-(k-1)//2 row halo so both TensorCores share the single batch.
    fits = [bt for bt in cands if bt * bytes_per_batch <= target_bytes]
    if fits:
        return max(fits)
    return min(cands)   # smallest legal block; caller bumps vmem_limit if needed


def _make_eca_kernel(k, channels, inv_hw):
    pad = (k - 1) // 2
    pow2 = (channels & (channels - 1)) == 0

    def kernel(w_ref, x_ref, o_ref):
        # w_ref : SMEM (k,) f32 conv taps (scalar-prefetched)
        # x_ref : VMEM (Rt, HW) rows = (batch, channel) flattened
        # o_ref : VMEM (Rt, HW)
        rows = x_ref.shape[0]                                  # Rt = Bt*C (static)

        # --- AdaptiveAvgPool2d(1): f32-accumulated mean over the lane axis.
        # Block lanes span exactly the real HW (full-extent last dim).
        pooled = jnp.sum(x_ref[...], axis=-1, keepdims=True,
                         dtype=jnp.float32) * inv_hw           # (Rt, 1) f32

        # --- Conv1d(1, 1, k, padding=(k-1)//2, bias=False) over channels.
        # out[c] = sum_d w[d] * in[c + d - pad], zero padding at channel edges.
        # A row's channel index is row % C; taps that would cross a channel
        # edge (== batch boundary inside the block / roll wrap-around) are
        # masked to zero, matching PyTorch zero padding.
        row = jax.lax.broadcasted_iota(jnp.int32, pooled.shape, 0)
        ch = (row & (channels - 1)) if pow2 else (row % channels)
        acc = w_ref[pad] * pooled                              # center tap, s == 0
        for d in range(k):                                     # k is tiny & static
            s = d - pad
            if s == 0:
                continue
            rolled = pltpu.roll(pooled, shift=(-s) % rows, axis=0)
            valid = (ch + s).astype(jnp.uint32) < channels     # single unsigned cmp
            acc = acc + jnp.where(valid, w_ref[d] * rolled, 0.0)

        # --- Sigmoid gate in f32; rescale x in its native dtype, re-reading
        # the ref so the big tile is never kept live across the conv section.
        y = jax.nn.sigmoid(acc).astype(o_ref.dtype)            # (Rt, 1)
        o_ref[...] = x_ref[...] * y                            # broadcast over lanes

    return kernel


@jax.jit
def eca_forward(x, weight):
    """x: (B, C, H, W) NCHW, weight: (k,) Conv1d weights. Returns (B, C, H, W)."""
    B, C, H, W = x.shape
    HW = H * W
    k = int(weight.shape[0])
    itemsize = jnp.dtype(x.dtype).itemsize

    # Lane axis = full spatial extent (no padding pass, no slice pass).
    x2 = x.reshape(B * C, HW)

    # Generation-aware budgets: v7x has 64 MiB physical VMEM & 2 TCs;
    # v5e/v6e have 128 MiB & 1 TC.
    vmem_cap = _tpu_vmem_bytes()
    small_vmem = vmem_cap <= 80 * 1024 * 1024          # v7x
    if small_vmem:
        target_bytes, base_limit, cap_limit, two_cores = (4 << 20, 32 << 20, 48 << 20, True)
    else:
        target_bytes, base_limit, cap_limit, two_cores = (8 << 20, 64 << 20, 96 << 20, False)

    Bt = _pick_batch_tile(B, C, C * HW * itemsize,
                          target_bytes=target_bytes, two_cores=two_cores)
    Rt = Bt * C
    grid = (B // Bt,)

    # 2 pipeline buffers x (in + out) + headroom must fit the scoped budget.
    block_bytes = Rt * HW * itemsize
    need = 4 * block_bytes + (1 << 20)
    vmem_limit = int(min(cap_limit, max(base_limit, need)))
    # TODO(synk): if `need` still exceeds cap_limit (huge C*HW per batch),
    # tile the spatial axis with a two-pass pool instead of one row slab.

    out = pl.pallas_call(
        _make_eca_kernel(k, C, 1.0 / HW),
        out_shape=jax.ShapeDtypeStruct((B * C, HW), x.dtype),
        grid_spec=pltpu.PrefetchScalarGridSpec(
            num_scalar_prefetch=1,                            # weight -> SMEM
            grid=grid,
            in_specs=[pl.BlockSpec((Rt, HW), lambda r, w: (r, 0))],
            out_specs=pl.BlockSpec((Rt, HW), lambda r, w: (r, 0)),
        ),
        compiler_params=pltpu.CompilerParams(
            dimension_semantics=("parallel",),                # shard rows on v7x 2 TCs
            vmem_limit_bytes=vmem_limit,
        ),
        # Operand indices include the scalar-prefetch weight: 0=weight, 1=x2.
        input_output_aliases={1: 0},
    )(weight.astype(jnp.float32), x2)

    return out.reshape(B, C, H, W)


def _eca_reference(x, weight):
    """Pure-JAX reference of the PyTorch forward."""
    C = x.shape[1]
    k = weight.shape[0]
    pad = (k - 1) // 2
    pooled = jnp.mean(x, axis=(2, 3))                             # (B, C)
    padded = jnp.pad(pooled, ((0, 0), (pad, pad)))
    conv = sum(weight[d] * padded[:, d:d + C] for d in range(k))  # (B, C)
    y = jax.nn.sigmoid(conv)[:, :, None, None]
    return x * y


if __name__ == "__main__":
    key = jax.random.PRNGKey(0)
    kx, kw, kx2 = jax.random.split(key, 3)

    C = 16
    k = eca_kernel_size(C)                       # channels=16 -> k=3
    bound = 1.0 / math.sqrt(k)
    weight = jax.random.uniform(kw, (k,), dtype=jnp.float32,
                                minval=-bound, maxval=bound)

    # Case 1: spatial a multiple of 128 lanes (16x16 -> HW=256).
    x1 = jax.random.normal(kx, (2, C, 16, 16), dtype=jnp.float32)
    out1 = jax.block_until_ready(eca_forward(x1, weight))
    ref1 = _eca_reference(x1, weight)
    assert out1.shape == x1.shape and out1.dtype == x1.dtype
    assert jnp.allclose(out1, ref1, atol=1e-5, rtol=1e-5)

    # Case 2: spatial NOT a multiple of 128 (7x7 -> HW=49) — exercises the
    # full-extent last-dim block (no wrapper pad/slice).
    x2 = jax.random.normal(kx2, (2, C, 7, 7), dtype=jnp.float32)
    out2 = jax.block_until_ready(eca_forward(x2, weight))
    ref2 = _eca_reference(x2, weight)
    assert out2.shape == x2.shape and out2.dtype == x2.dtype
    assert jnp.allclose(out2, ref2, atol=1e-5, rtol=1e-5)

    print("KERNEL_OK")
</pallas_src>

<mosaic_0001>
module attributes {stable_mosaic.version = 11 : i64} {
  func.func @kernel(%arg0: i32, %arg1: memref<3xf32, #tpu.memory_space<smem>>, %arg2: memref<16x256xf32, #tpu.memory_space<vmem>>, %arg3: memref<16x256xf32, #tpu.memory_space<vmem>>) attributes {dimension_semantics = [#tpu.dimension_semantics<parallel>], iteration_bounds = array<i64: 2>, scalar_prefetch = 1 : i64, scratch_operands = 0 : i64, tpu.core_type = #tpu.core_type<tc>, window_params = [{transform_indices = @transform_0, window_bounds = array<i64: 16, 256>}, {transform_indices = @transform_1, window_bounds = array<i64: 16, 256>}]} {
    %c0 = arith.constant 0 : index
    %c0_0 = arith.constant 0 : index
    %0 = vector.load %arg2[%c0, %c0_0] : memref<16x256xf32, #tpu.memory_space<vmem>>, vector<16x256xf32>
    %cst = arith.constant dense<0.000000e+00> : vector<16xf32>
    %1 = vector.multi_reduction <add>, %0, %cst [1] : vector<16x256xf32> to vector<16xf32>
    %2 = vector.shape_cast %1 : vector<16xf32> to vector<16x1xf32>
    %cst_1 = arith.constant 3.906250e-03 : f32
    %3 = vector.broadcast %cst_1 : f32 to vector<16x1xf32>
    %4 = arith.mulf %2, %3 : vector<16x1xf32>
    %5 = tpu.iota {dimensions = array<i32: 0>} : vector<16x1xi32>
    %c15_i32 = arith.constant 15 : i32
    %6 = vector.broadcast %c15_i32 : i32 to vector<16x1xi32>
    %7 = arith.andi %5, %6 : vector<16x1xi32>
    %c1 = arith.constant 1 : index
    %8 = memref.load %arg1[%c1] : memref<3xf32, #tpu.memory_space<smem>>
    %9 = vector.broadcast %8 : f32 to vector<16x1xf32>
    %10 = arith.mulf %9, %4 : vector<16x1xf32>
    %c1_i32 = arith.constant 1 : i32
    %11 = tpu.dynamic_rotate %4 by %c1_i32 dim 0 : vector<16x1xf32>, i32 -> vector<16x1xf32>
    %c-1_i32 = arith.constant -1 : i32
    %12 = vector.broadcast %c-1_i32 : i32 to vector<16x1xi32>
    %13 = arith.addi %7, %12 : vector<16x1xi32>
    %c16_i32 = arith.constant 16 : i32
    %14 = vector.broadcast %c16_i32 : i32 to vector<16x1xi32>
    %15 = arith.cmpi ult, %13, %14 : vector<16x1xi32>
    %c0_2 = arith.constant 0 : index
    %16 = memref.load %arg1[%c0_2] : memref<3xf32, #tpu.memory_space<smem>>
    %17 = vector.broadcast %16 : f32 to vector<16x1xf32>
    %18 = arith.mulf %17, %11 : vector<16x1xf32>
    %cst_3 = arith.constant 0.000000e+00 : f32
    %19 = vector.broadcast %cst_3 : f32 to vector<16x1xf32>
    %20 = arith.select %15, %18, %19 : vector<16x1xi1>, vector<16x1xf32>
    %21 = arith.addf %10, %20 : vector<16x1xf32>
    %c15_i32_4 = arith.constant 15 : i32
    %22 = tpu.dynamic_rotate %4 by %c15_i32_4 dim 0 : vector<16x1xf32>, i32 -> vector<16x1xf32>
    %c1_i32_5 = arith.constant 1 : i32
    %23 = vector.broadcast %c1_i32_5 : i32 to vector<16x1xi32>
    %24 = arith.addi %7, %23 : vector<16x1xi32>
    %c16_i32_6 = arith.constant 16 : i32
    %25 = vector.broadcast %c16_i32_6 : i32 to vector<16x1xi32>
    %26 = arith.cmpi ult, %24, %25 : vector<16x1xi32>
    %c2 = arith.constant 2 : index
    %27 = memref.load %arg1[%c2] : memref<3xf32, #tpu.memory_space<smem>>
    %28 = vector.broadcast %27 : f32 to vector<16x1xf32>
    %29 = arith.mulf %28, %22 : vector<16x1xf32>
    %cst_7 = arith.constant 0.000000e+00 : f32
    %30 = vector.broadcast %cst_7 : f32 to vector<16x1xf32>
    %31 = arith.select %26, %29, %30 : vector<16x1xi1>, vector<16x1xf32>
    %32 = arith.addf %21, %31 : vector<16x1xf32>
    %33 = arith.negf %32 : vector<16x1xf32>
    %34 = math.exp %33 : vector<16x1xf32>
    %cst_8 = arith.constant 1.000000e+00 : f32
    %35 = vector.broadcast %cst_8 : f32 to vector<16x1xf32>
    %36 = arith.addf %35, %34 : vector<16x1xf32>
    %37 = arith.divf %35, %36 : vector<16x1xf32>
    %c0_9 = arith.constant 0 : index
    %c0_10 = arith.constant 0 : index
    %38 = vector.load %arg2[%c0_9, %c0_10] : memref<16x256xf32, #tpu.memory_space<vmem>>, vector<16x256xf32>
    %39 = vector.broadcast %37 : vector<16x1xf32> to vector<16x256xf32>
    %40 = arith.mulf %38, %39 : vector<16x256xf32>
    %c0_11 = arith.constant 0 : index
    %c0_12 = arith.constant 0 : index
    %41 = vector.load %arg3[%c0_11, %c0_12] : memref<16x256xf32, #tpu.memory_space<vmem>>, vector<16x256xf32>
    tpu.vector_store %arg3[%c0_11, %c0_12], %40 {strides = array<i32>} : memref<16x256xf32, #tpu.memory_space<vmem>>, vector<16x256xf32>,
    return
  }
  func.func @transform_0(%arg0: i32, %arg1: memref<3xf32, #tpu.memory_space<smem>>) -> (i32, i32) {
    %c0_i32 = arith.constant 0 : i32
    %c0_i32_0 = arith.constant 0 : i32
    return %arg0, %c0_i32 : i32, i32
  }
  func.func @transform_1(%arg0: i32, %arg1: memref<3xf32, #tpu.memory_space<smem>>) -> (i32, i32) {
    %c0_i32 = arith.constant 0 : i32
    %c0_i32_0 = arith.constant 0 : i32
    return %arg0, %c0_i32 : i32, i32
  }
}

</mosaic_0001>

<llo_original>
// kernel: eca_forward.1
$region0: #{eca_forward.1}
  #allocation0 [shape = 'u32[]', space=smem, size = 0x4, offset = 0x4, fixed_abs, tag = 'smem constant byte address 0x4 - core index']
  #allocation1 [shape = 'u32[144,128]{1,0:T(1,128)}', space=vmem, size = 0x12000, scoped, tag = 'internal scratch']
  #allocation2 [shape = 's32[1]{0}', space=sflag, size = 0x4, scoped, tag = 'scoped memory for eca_forward.1']
  #allocation3 [shape = 'u8[512]{0}', space=smem, size = 0x200, scoped, tag = 'prefetched SMEM operand 0']
  %s0 = inlined_call_operand.vmem [shape: f32[3], index: 0, kind: input, shape index: {}]
  %s1 = inlined_call_operand.vmem [shape: f32[32,256], index: 1, kind: input, shape index: {}, may-alias: {1,2}]
  %s2 = inlined_call_operand.vmem [shape: f32[32,256], index: 2, kind: output, shape index: {}, may-alias: {1,2}]
  %s3 = sld [smem:[#allocation0]]
  $region37: #{eca_forward.1} parent=0
    _
  %s5 = ssub.s32 1, %s3
  %s6 = scalar_select 0, %s5, %s3
  %s7 = sshll.u32 %s0, 4
  %s8 = int_to_ptr.vmem [resolvable:$true] %s7
  %10 = dma.vmem_to_smem %s8, 16, [#allocation3], [#allocation2]
  %11 = dma.done [#allocation2], 16
  %12 = sfence
  loop: start=0, step=1, limit=4
  $region2: #{eca_forward.1} parent=0 // loop_pre_header
    _
  $region3: #{eca_forward.1} parent=0 // loop_header
    %s14 = sphi 0, %s18
    %p15 = scmp.ge.s32.totalorder %s14, 4
    %s24 = sphi 0, %s26
    %s27 = sphi 0, %s24
    %s28 = sphi 0, %s27
    %s44 = sphi 0, %s28
    %s50 = sphi 0, %s52
    %s53 = sphi 0, %s50
    %s54 = sphi 0, %s53
    %s70 = sphi 0, %s54
  $region4: #{eca_forward.1} parent=0 // loop_header_branch
    %17 = sbr.rel (%p15) target = $region8
  $region5: #{eca_forward.1} parent=0 // loop_body
    %s19 = ssub.s32 %s14, 1
    %s20 = ssub.s32 %s14, 2
    %s21 = sadd.s32 %s14, 1
    %s22 = ssub.s32 %s14, %s21
    %p23 = scmp.eq.s32.totalorder %s22, 0
    %s25 = sadd.s32 %s24, 1
    %s26 = scalar_select %p23, %s24, %s25
    %p29 = pneg %p23
    %p30 = scmp.eq.s32.totalorder %s14, 1
    %p31 = por %p29, %p30
    %p32 = scmp.ne.s32.totalorder %s24, %s27
    %p33 = scmp.eq.s32.totalorder %s14, 0
    %p34 = por %p32, %p33
    %p35 = scmp.ne.s32.totalorder %s24, %s27
    %p36 = scmp.eq.s32.totalorder %s19, 1
    %p37 = por %p35, %p36
    %p38 = scmp.ne.s32.totalorder %s27, %s28
    %p39 = scmp.eq.s32.totalorder %s19, 0
    %p40 = por %p38, %p39
    %p41 = scmp.ne.s32.totalorder %s27, %s28
    %p42 = scmp.eq.s32.totalorder %s20, 1
    %p43 = por %p41, %p42
    %p45 = scmp.ne.s32.totalorder %s28, %s44
    %p46 = scmp.eq.s32.totalorder %s20, 0
    %p47 = por %p45, %p46
    %s48 = ssub.s32 %s14, %s21
    %p49 = scmp.eq.s32.totalorder %s48, 0
    %s51 = sadd.s32 %s50, 1
    %s52 = scalar_select %p49, %s50, %s51
    %p55 = pneg %p49
    %p56 = scmp.eq.s32.totalorder %s14, 1
    %p57 = por %p55, %p56
    %p58 = scmp.ne.s32.totalorder %s50, %s53
    %p59 = scmp.eq.s32.totalorder %s14, 0
    %p60 = por %p58, %p59
    %p61 = scmp.ne.s32.totalorder %s50, %s53
    %p62 = scmp.eq.s32.totalorder %s19, 1
    %p63 = por %p61, %p62
    %p64 = scmp.ne.s32.totalorder %s53, %s54
    %p65 = scmp.eq.s32.totalorder %s19, 0
    %p66 = por %p64, %p65
    %p67 = scmp.ne.s32.totalorder %s53, %s54
    %p68 = scmp.eq.s32.totalorder %s20, 1
    %p69 = por %p67, %p68
    %p71 = scmp.ne.s32.totalorder %s54, %s70
    %p72 = scmp.eq.s32.totalorder %s20, 0
    %p73 = por %p71, %p72
    %p74 = scmp.le.s32.totalorder 1, %s14
    %p75 = scmp.lt.s32.totalorder %s14, 3
    %p76 = pnand %p74, %p75
    %p77 = pneg %p76
    // Predicated region
    $region9: #{eca_forward.1} parent=5 // pred_check
      _
    $region10: #{eca_forward.1} parent=5 // pred_check_branch
      %79 = sbr.rel (%p76) target = $region12
    $region11: #{eca_forward.1} parent=5 // pred_region
      %s80 = ssub.s32 %s14, 1
    $region12: #{eca_forward.1} parent=5 // pred_fallthru
      _
    %p81 = scmp.lt.s32.totalorder %s14, 2
    // Predicated region
    $region13: #{eca_forward.1} parent=5 // pred_check
      %p82 = pneg %p81
    $region14: #{eca_forward.1} parent=5 // pred_check_branch
      %84 = sbr.rel (%p82) target = $region16
    $region15: #{eca_forward.1} parent=5 // pred_region
      // Predicated region
      $region17: #{eca_forward.1} parent=15 // pred_check
        %p85 = pneg %p34
      $region18: #{eca_forward.1} parent=15 // pred_check_branch
        %87 = sbr.rel (%p85) target = $region20
      $region19: #{eca_forward.1} parent=15 // pred_region
        %s88 = smul.u32 2, %s14
        %p89 = scmp.lt.s32.totalorder %s88, 3
        %s90 = scalar_select %p89, %s88, 3
        %s91 = smul.addr %s90, 2
        %s92 = smul.addr %s91, 8
        %s93 = scalar_lea.vmem %s1, %s92
        %s94 = smul.u32 2, %s14
      $region20: #{eca_forward.1} parent=15 // pred_fallthru
        _
    $region16: #{eca_forward.1} parent=5 // pred_fallthru
      _
    %p95 = scmp.le.s32.totalorder 1, %s14
    %p96 = scmp.lt.s32.totalorder %s14, 3
    %p97 = pnand %p95, %p96
    %p98 = pneg %p97
    // Predicated region
    $region21: #{eca_forward.1} parent=5 // pred_check
      _
    $region22: #{eca_forward.1} parent=5 // pred_check_branch
      %100 = sbr.rel (%p97) target = $region24
    $region23: #{eca_forward.1} parent=5 // pred_region
      %s101 = ssub.s32 %s14, 1
      %s102 = smul.u32 2, %s19
      %p103 = scmp.lt.s32.totalorder %s102, 3
      %s104 = scalar_select %p103, %s102, 3
      %s105 = smul.addr %s104, 2
      %s106 = smul.addr %s105, 8
      %s107 = scalar_lea.vmem %s1, %s106
      %p108 = pneg %p40
      %p109 = pneg %p37
      %p110 = pneg %p66
      %p111 = pneg %p63
      %s112 = smul.u32 2, %s19
      %p113 = scmp.lt.s32.totalorder %s112, 3
      %s114 = scalar_select %p113, %s112, 3
      %s115 = smul.addr %s114, 2
      %s116 = smul.addr %s115, 8
      %s117 = scalar_lea.vmem %s2, %s116
      %s118 = smul.u32 2, %s19
      %p119 = scmp.lt.s32.totalorder %s118, 3
      %s120 = scalar_select %p119, %s118, 3
      %s121 = smul.addr %s120, 2
      %s122 = smul.addr %s121, 8
      %s123 = scalar_lea.vmem %s1, %s122
      %s124 = smul.u32 2, %s19
      %s125 = smul.u32 2, %s19
      %p126 = scmp.lt.s32.totalorder %s125, 3
      %s127 = scalar_select %p126, %s125, 3
      %s128 = smul.addr %s127, 2
      %s129 = smul.addr %s128, 8
      %s130 = scalar_lea.vmem %s2, %s129
      %s131 = smul.u32 2, %s19
      %v132 = vld [vmem:[%s123] sm:$0xff]
      %v133 = vld [vmem:[%s123 + $0x8] sm:$0xff]
      %v134 = vld [vmem:[%s123 + $0x10] sm:$0xff]
      %v135 = vld [vmem:[%s123 + $0x18] sm:$0xff]
      %v136 = vadd.f32 %v132, %v133
      %137 = vadd.xlane.f32.xlu0 %v136
      %v138 = vpop.xlane.xlu0 %137
      %v139 = vadd.f32 %v134, %v135
      %140 = vadd.xlane.f32.xlu0 %v139
      %v141 = vpop.xlane.xlu0 %140
      %v142 = vmul.f32 %v138, 0.00390625
      %v143 = vmul.f32 %v141, 0.00390625
      %v144 = vlaneseq
      %v145 = vshrl.u32 %v144, 7
      %v146 = vadd.s32 %v145, 8
      %v147 = vand.u32 %v145, 15
      %v148 = vand.u32 %v146, 15
      %s149 = sld [smem:[#allocation3 + $0x1]]
      %v150 = vstv %s149
      %v151 = vmul.f32 %v150, %v142
      %v152 = vmul.f32 %v150, %v143
      %v153 = vrot.slane %v142, 7
      %v154 = vrot.slane %v143, 7
      %vm155 = vcmp.lt.s32.totalorder %v145, 1
      %v156 = vsel %vm155, %v153, %v154
      %v157 = vsel %vm155, %v154, %v153
      %v158 = vadd.s32 %v147, 4294967295
      %v159 = vadd.s32 %v148, 4294967295
      %vm160 = vcmp.lt.u32.totalorder %v158, 16
      %vm161 = vcmp.lt.u32.totalorder %v159, 16
      %s162 = sld [smem:[#allocation3]]
      %v163 = vstv %s162
      %v164 = vmul.f32 %v163, %v157
      %v165 = vmul.f32 %v163, %v156
      %v166 = vsel %vm160, %v164, 0.0
      %v167 = vsel %vm161, %v165, 0.0
      %v168 = vadd.f32 %v151, %v166
      %v169 = vadd.f32 %v152, %v167
      %v170 = vrot.slane %v142, 1
      %v171 = vrot.slane %v143, 1
      %vm172 = vcmp.lt.s32.totalorder %v145, 7
      %v173 = vsel %vm172, %v170, %v171
      %v174 = vsel %vm172, %v171, %v170
      %v175 = vadd.s32 %v147, 1
      %v176 = vadd.s32 %v148, 1
      %vm177 = vcmp.lt.u32.totalorder %v175, 16
      %vm178 = vcmp.lt.u32.totalorder %v176, 16
      %s179 = sld [smem:[#allocation3 + $0x2]]
      %v180 = vstv %s179
      %v181 = vmul.f32 %v180, %v173
      %v182 = vmul.f32 %v180, %v174
      %v183 = vsel %vm177, %v181, 0.0
      %v184 = vsel %vm178, %v182, 0.0
      %v185 = vadd.f32 %v168, %v183
      %v186 = vadd.f32 %v169, %v184
      %v187 = vxor.u32 %v185, 2147483648
      %v188 = vxor.u32 %v186, 2147483648
      %v189 = vmul.f32 %v187, 1.442695
      %v190 = vpow.pop %v189
      %v191 = vmul.f32 %v188, 1.442695
      %v192 = vpow.pop %v191
      %v193 = vadd.f32 %v190, 1.0
      %v194 = vadd.f32 %v192, 1.0
      %v195 = vrcp.pop %v193
      %v196 = vmul.f32 1.0, %v195
      %v197 = vrcp.pop %v194
      %v198 = vmul.f32 1.0, %v197
      %200 = vset.pattern.permute.xlu0 0
      %201 = vperm.xlu0 %200, %v196
      %v202 = vpop.permute.xlu0 %201
      %205 = vset.pattern.permute.xlu0 0
      %206 = vperm.xlu0 %205, %v198
      %v207 = vpop.permute.xlu0 %206
      %v209 = vmul.f32 %v132, %v202
      %v210 = vmul.f32 %v133, %v202
      %v211 = vmul.f32 %v134, %v207
      %v212 = vmul.f32 %v135, %v207
      %213 = vst [vmem:[%s130] sm:$0xff] %v209
      %214 = vst [vmem:[%s130 + $0x8] sm:$0xff] %v210
      %215 = vst [vmem:[%s130 + $0x10] sm:$0xff] %v211
      %216 = vst [vmem:[%s130 + $0x18] sm:$0xff] %v212
      %s217 = smul.u32 2, %s19
      %p218 = scmp.lt.s32.totalorder %s217, 3
      %s219 = scalar_select %p218, %s217, 3
      %s220 = smul.addr %s219, 2
      %s221 = smul.addr %s220, 8
      %s222 = scalar_lea.vmem %s2, %s221
      // Predicated region
      $region25: #{eca_forward.1} parent=23 // pred_check
        %p223 = pneg %p63
      $region26: #{eca_forward.1} parent=23 // pred_check_branch
        %225 = sbr.rel (%p223) target = $region28
      $region27: #{eca_forward.1} parent=23 // pred_region
        %s226 = smul.u32 2, %s19
      $region28: #{eca_forward.1} parent=23 // pred_fallthru
        _
    $region24: #{eca_forward.1} parent=5 // pred_fallthru
      _
    %p227 = scmp.le.s32.totalorder 2, %s14
    // Predicated region
    $region29: #{eca_forward.1} parent=5 // pred_check
      %p228 = pneg %p227
    $region30: #{eca_forward.1} parent=5 // pred_check_branch
      %230 = sbr.rel (%p228) target = $region32
    $region31: #{eca_forward.1} parent=5 // pred_region
      %s231 = ssub.s32 %s14, 2
      // Predicated region
      $region33: #{eca_forward.1} parent=31 // pred_check
        %p232 = pneg %p69
      $region34: #{eca_forward.1} parent=31 // pred_check_branch
        %234 = sbr.rel (%p232) target = $region36
      $region35: #{eca_forward.1} parent=31 // pred_region
        %s235 = smul.u32 2, %s20
        %p236 = scmp.lt.s32.totalorder %s235, 3
        %s237 = scalar_select %p236, %s235, 3
        %s238 = smul.addr %s237, 2
        %s239 = smul.addr %s238, 8
        %s240 = scalar_lea.vmem %s2, %s239
      $region36: #{eca_forward.1} parent=31 // pred_fallthru
        _
    $region32: #{eca_forward.1} parent=5 // pred_fallthru
      _
  $region6: #{eca_forward.1} parent=0 // loop_footer
    %s18 = sadd.s32 1, %s14
  $region7: #{eca_forward.1} parent=0 // loop_footer_branch
    %13 = sbr.rel target = $region3
  $region8: #{eca_forward.1} parent=0 // loop_exit
    _

</llo_original>
